<compile_context>
chip_gen: v7x
topology: tpu7x:2x2x1
jax: 0.10.0
libtpu: 0.0.40
codegen_flags: <defaults>
</compile_context>

<pallas_src>
import functools

import jax
import jax.numpy as jnp
from jax.experimental import pallas as pl
from jax.experimental.pallas import tpu as pltpu


# ----------------------------------------------------------------------------- kernels


def _expert_kernel_fused(x_ref, wgu_ref, wd_ref, o_ref, acc_ref, *, tile_d):
    """One (expert, T-tile, D-tile) step with gate+up fused into a single MXU call.

    x_ref:   (tT, H)        activations (native dtype, e.g. bf16)
    wgu_ref: (H, 2*tD)      [gate tile | up tile] interleaved weights
    wd_ref:  (tD, H)        down-projection tile
    o_ref:   (tT, H)        output tile (written at the last D step only)
    acc_ref: (tT, H) f32    VMEM accumulator, resident across the D axis
    """
    d = pl.program_id(2)

    @pl.when(d == 0)
    def _init():
        acc_ref[...] = jnp.zeros_like(acc_ref)

    x = x_ref[...]
    # Single fused MXU call for gate and up; f32 accumulation on the MXU.
    gu = jnp.dot(x, wgu_ref[...], preferred_element_type=jnp.float32)  # (tT, 2*tD)
    gate = gu[:, :tile_d]
    up = gu[:, tile_d:]
    # SiLU in f32 (EUP logistic), then cast back to the weight dtype for the MXU.
    h = (up * (gate * jax.lax.logistic(gate))).astype(wd_ref.dtype)
    acc_ref[...] += jnp.dot(h, wd_ref[...], preferred_element_type=jnp.float32)

    @pl.when(d == pl.num_programs(2) - 1)
    def _finalize():
        o_ref[...] = acc_ref[...].astype(o_ref.dtype)


def _expert_kernel_split(x_ref, wg_ref, wu_ref, wd_ref, o_ref, acc_ref):
    """Fallback variant (two matmuls) used when tile_d is not a multiple of 128."""
    d = pl.program_id(2)

    @pl.when(d == 0)
    def _init():
        acc_ref[...] = jnp.zeros_like(acc_ref)

    x = x_ref[...]
    gate = jnp.dot(x, wg_ref[...], preferred_element_type=jnp.float32)
    up = jnp.dot(x, wu_ref[...], preferred_element_type=jnp.float32)
    h = (up * (gate * jax.lax.logistic(gate))).astype(wd_ref.dtype)
    acc_ref[...] += jnp.dot(h, wd_ref[...], preferred_element_type=jnp.float32)

    @pl.when(d == pl.num_programs(2) - 1)
    def _finalize():
        o_ref[...] = acc_ref[...].astype(o_ref.dtype)


# ----------------------------------------------------------------------------- helpers


def _largest_aligned_divisor(full, align, cap):
    """Largest multiple of `align` dividing `full` that is <= cap; else `full`."""
    if full <= cap:
        return full
    t = (min(cap, full) // align) * align
    while t >= align:
        if full % t == 0:
            return t
        t -= align
    return full


def _vmem_bytes_estimate(tile_t, tile_d, hidden_size, itemsize):
    """Rough per-step VMEM footprint (BlockSpec double-buffers every in/out tile)."""
    x_t = tile_t * hidden_size * itemsize
    w_gu = hidden_size * 2 * tile_d * itemsize
    w_d = tile_d * hidden_size * itemsize
    o_t = tile_t * hidden_size * itemsize
    acc = tile_t * hidden_size * 4
    interm = tile_t * 2 * tile_d * 4 + tile_t * hidden_size * 4
    return 2 * (x_t + w_gu + w_d + o_t) + acc + interm


def _vmem_capacity_bytes():
    try:
        return int(pltpu.get_tpu_info().vmem_capacity_bytes)
    except Exception:
        return 64 * 1024 * 1024  # conservative (v7x) fallback


# ----------------------------------------------------------------------------- wrapper


def llama4_text_experts_pallas(hidden_states, w_gate, w_up, w_down, *,
                               num_experts, hidden_size, expert_dim,
                               tile_t=None, tile_d=None):
    """
    hidden_states: (num_tokens, hidden_size)   -- tokens already sorted per expert
    w_gate, w_up : (num_experts * hidden_size, expert_dim)   (torch Linear weight layout)
    w_down       : (num_experts * expert_dim, hidden_size)
    returns      : (num_tokens, hidden_size)
    """
    E, H, D = num_experts, hidden_size, expert_dim
    num_tokens = hidden_states.shape[0]
    if num_tokens % E != 0:
        raise ValueError("num_tokens must be divisible by num_experts "
                         "(tokens are expected to be pre-sorted/padded per expert).")
    T = num_tokens // E

    # ---- generation-aware tile selection against the VMEM budget -------------
    vmem_budget = int(_vmem_capacity_bytes() * 0.85)
    itemsize = jnp.dtype(hidden_states.dtype).itemsize

    if tile_t is None:
        tile_t = _largest_aligned_divisor(T, 8, 256)
    else:
        assert T % tile_t == 0 and (tile_t == T or tile_t % 8 == 0)

    if tile_d is None:
        cap = 2048
        while True:
            tile_d = _largest_aligned_divisor(D, 128, cap)
            if (_vmem_bytes_estimate(tile_t, tile_d, H, itemsize) <= vmem_budget
                    or cap <= 128):
                break
            cap //= 2
    else:
        assert D % tile_d == 0 and (tile_d == D or tile_d % 128 == 0)

    n_t = T // tile_t
    n_d = D // tile_d

    # ---- operand packing ------------------------------------------------------
    x = hidden_states.reshape(E, T, H)
    wd = w_down.reshape(E, D, H)

    # Fuse gate + up only if the fused result can be sliced on a lane boundary.
    fuse = (tile_d % 128 == 0)

    flops = 6 * E * T * H * D
    bytes_accessed = int(itemsize) * (2 * E * T * H + 3 * E * H * D * max(1, n_t))
    cost = pl.CostEstimate(flops=flops, transcendentals=E * T * D,
                           bytes_accessed=bytes_accessed)

    compiler_params = pltpu.CompilerParams(
        dimension_semantics=("parallel", "parallel", "arbitrary"),
        vmem_limit_bytes=vmem_budget,
    )

    x_spec = pl.BlockSpec((pl.Squeezed(), tile_t, H), lambda e, t, d: (e, t, 0))
    wd_spec = pl.BlockSpec((pl.Squeezed(), tile_d, H), lambda e, t, d: (e, d, 0))
    out_spec = pl.BlockSpec((pl.Squeezed(), tile_t, H), lambda e, t, d: (e, t, 0))

    if fuse:
        # Interleave gate/up weights per D-tile so block d of the fused tensor is
        # the contiguous slab [gate tile d | up tile d] of width 2*tile_d.
        # TODO(synk): in production, pre-fuse the weights once at load time
        # instead of repacking on every call.
        wg4 = w_gate.reshape(E, H, n_d, tile_d)
        wu4 = w_up.reshape(E, H, n_d, tile_d)
        wgu = jnp.concatenate([wg4, wu4], axis=3).reshape(E, H, 2 * D)

        kernel = functools.partial(_expert_kernel_fused, tile_d=tile_d)
        in_specs = [
            x_spec,
            pl.BlockSpec((pl.Squeezed(), H, 2 * tile_d), lambda e, t, d: (e, 0, d)),
            wd_spec,
        ]
        operands = (x, wgu, wd)
    else:
        wg = w_gate.reshape(E, H, D)
        wu = w_up.reshape(E, H, D)
        kernel = _expert_kernel_split
        in_specs = [
            x_spec,
            pl.BlockSpec((pl.Squeezed(), H, tile_d), lambda e, t, d: (e, 0, d)),
            pl.BlockSpec((pl.Squeezed(), H, tile_d), lambda e, t, d: (e, 0, d)),
            wd_spec,
        ]
        operands = (x, wg, wu, wd)

    out = pl.pallas_call(
        kernel,
        out_shape=jax.ShapeDtypeStruct((E, T, H), hidden_states.dtype),
        grid_spec=pltpu.PrefetchScalarGridSpec(
            num_scalar_prefetch=0,
            grid=(E, n_t, n_d),
            in_specs=in_specs,
            out_specs=out_spec,
            scratch_shapes=[pltpu.VMEM((tile_t, H), jnp.float32)],
        ),
        compiler_params=compiler_params,
        cost_estimate=cost,
    )(*operands)

    return out.reshape(num_tokens, H)


# ----------------------------------------------------------------------------- reference


def _reference(hidden_states, w_gate, w_up, w_down, *, num_experts, hidden_size, expert_dim):
    E, H, D = num_experts, hidden_size, expert_dim
    x = hidden_states.reshape(E, -1, H).astype(jnp.float32)
    wg = w_gate.reshape(E, H, D).astype(jnp.float32)
    wu = w_up.reshape(E, H, D).astype(jnp.float32)
    wd = w_down.reshape(E, D, H).astype(jnp.float32)
    gate = jnp.einsum("eth,ehd->etd", x, wg)
    up = jnp.einsum("eth,ehd->etd", x, wu)
    h = up * jax.nn.silu(gate)
    out = jnp.einsum("etd,edh->eth", h, wd)
    return out.reshape(-1, H).astype(hidden_states.dtype)


# ----------------------------------------------------------------------------- test


if __name__ == "__main__":

    def run_case(name, E, H, D, tokens_per_expert, dtype=jnp.float32,
                 tile_t=None, tile_d=None, seed=0):
        num_tokens = E * tokens_per_expert
        key = jax.random.PRNGKey(seed)
        k0, k1, k2, k3 = jax.random.split(key, 4)
        hidden_states = jax.random.normal(k0, (num_tokens, H), jnp.float32).astype(dtype)
        # torch nn.Linear weight layouts: (out_features, in_features)
        w_gate = (0.05 * jax.random.normal(k1, (E * H, D), jnp.float32)).astype(dtype)
        w_up = (0.05 * jax.random.normal(k2, (E * H, D), jnp.float32)).astype(dtype)
        w_down = (0.05 * jax.random.normal(k3, (E * D, H), jnp.float32)).astype(dtype)

        out = llama4_text_experts_pallas(
            hidden_states, w_gate, w_up, w_down,
            num_experts=E, hidden_size=H, expert_dim=D,
            tile_t=tile_t, tile_d=tile_d)
        out = jax.block_until_ready(out)

        ref = _reference(hidden_states, w_gate, w_up, w_down,
                         num_experts=E, hidden_size=H, expert_dim=D)

        assert out.shape == (num_tokens, H), name
        assert jnp.allclose(out.astype(jnp.float32), ref.astype(jnp.float32),
                            rtol=5e-3, atol=5e-3), name

    # 1) Small config; fused gate+up path, single D step.
    run_case("fused_single_step", E=2, H=64, D=128, tokens_per_expert=16)
    # 2) Tiled reduction path: grid=(E, T/8, D/128), f32 accumulator across D tiles.
    run_case("tiled_reduction", E=2, H=128, D=256, tokens_per_expert=16,
             tile_t=8, tile_d=128)
    # 3) Lane-unaligned expert_dim -> un-fused (two-matmul) fallback path.
    run_case("split_fallback", E=2, H=32, D=64, tokens_per_expert=16)

    print("KERNEL_OK")
</pallas_src>

<mosaic_0001>
module attributes {stable_mosaic.version = 11 : i64} {
  func.func @_expert_kernel_fused(%arg0: i32, %arg1: i32, %arg2: i32, %arg3: memref<1x16x64xf32, #tpu.memory_space<vmem>>, %arg4: memref<1x64x256xf32, #tpu.memory_space<vmem>>, %arg5: memref<1x128x64xf32, #tpu.memory_space<vmem>>, %arg6: memref<1x16x64xf32, #tpu.memory_space<vmem>>, %arg7: memref<16x64xf32, #tpu.memory_space<vmem>>) attributes {dimension_semantics = [#tpu.dimension_semantics<parallel>, #tpu.dimension_semantics<parallel>, #tpu.dimension_semantics<arbitrary>], iteration_bounds = array<i64: 2, 1, 1>, scalar_prefetch = 0 : i64, scratch_operands = 1 : i64, tpu.core_type = #tpu.core_type<tc>, window_params = [{transform_indices = @transform_0, window_bounds = array<i64: 1, 16, 64>}, {transform_indices = @transform_1, window_bounds = array<i64: 1, 64, 256>}, {transform_indices = @transform_2, window_bounds = array<i64: 1, 128, 64>}, {transform_indices = @transform_3, window_bounds = array<i64: 1, 16, 64>}]} {
    %c0_i32 = arith.constant 0 : i32
    %0 = arith.cmpi eq, %arg2, %c0_i32 : i32
    %1 = arith.extui %0 : i1 to i32
    %c0_i32_0 = arith.constant 0 : i32
    %2 = arith.cmpi ne, %1, %c0_i32_0 : i32
    scf.if %2 {
      %cst_17 = arith.constant 0.000000e+00 : f32
      %26 = vector.broadcast %cst_17 : f32 to vector<16x64xf32>
      %c0_18 = arith.constant 0 : index
      %c0_19 = arith.constant 0 : index
      %27 = vector.load %arg7[%c0_18, %c0_19] : memref<16x64xf32, #tpu.memory_space<vmem>>, vector<16x64xf32>
      tpu.vector_store %arg7[%c0_18, %c0_19], %26 {strides = array<i32>} : memref<16x64xf32, #tpu.memory_space<vmem>>, vector<16x64xf32>,
    } else {
    }
    %c0 = arith.constant 0 : index
    %c0_1 = arith.constant 0 : index
    %c0_2 = arith.constant 0 : index
    %3 = vector.load %arg3[%c0, %c0_1, %c0_2] : memref<1x16x64xf32, #tpu.memory_space<vmem>>, vector<1x16x64xf32>
    %4 = vector.shape_cast %3 : vector<1x16x64xf32> to vector<16x64xf32>
    %c0_3 = arith.constant 0 : index
    %c0_4 = arith.constant 0 : index
    %c0_5 = arith.constant 0 : index
    %5 = vector.load %arg4[%c0_3, %c0_4, %c0_5] : memref<1x64x256xf32, #tpu.memory_space<vmem>>, vector<1x64x256xf32>
    %6 = vector.shape_cast %5 : vector<1x64x256xf32> to vector<64x256xf32>
    %cst = arith.constant dense<0.000000e+00> : vector<16x256xf32>
    %7 = tpu.matmul %4, %6, %cst {dimension_numbers = #tpu.dot_dimension_numbers<[1], [0], [0], [1], [0, 0, 1, 1], [], []>} : vector<16x64xf32>, vector<64x256xf32>, vector<16x256xf32> -> vector<16x256xf32>
    %8 = vector.extract_strided_slice %7 {offsets = [0, 0], sizes = [16, 128], strides = [1, 1]} : vector<16x256xf32> to vector<16x128xf32>
    %9 = vector.extract_strided_slice %7 {offsets = [0, 128], sizes = [16, 128], strides = [1, 1]} : vector<16x256xf32> to vector<16x128xf32>
    %10 = arith.negf %8 : vector<16x128xf32>
    %11 = math.exp %10 : vector<16x128xf32>
    %cst_6 = arith.constant 1.000000e+00 : f32
    %12 = vector.broadcast %cst_6 : f32 to vector<16x128xf32>
    %13 = arith.addf %12, %11 : vector<16x128xf32>
    %14 = arith.divf %12, %13 : vector<16x128xf32>
    %15 = arith.mulf %8, %14 : vector<16x128xf32>
    %16 = arith.mulf %9, %15 : vector<16x128xf32>
    %c0_7 = arith.constant 0 : index
    %c0_8 = arith.constant 0 : index
    %17 = vector.load %arg7[%c0_7, %c0_8] : memref<16x64xf32, #tpu.memory_space<vmem>>, vector<16x64xf32>
    %c0_9 = arith.constant 0 : index
    %c0_10 = arith.constant 0 : index
    %c0_11 = arith.constant 0 : index
    %18 = vector.load %arg5[%c0_9, %c0_10, %c0_11] : memref<1x128x64xf32, #tpu.memory_space<vmem>>, vector<1x128x64xf32>
    %19 = vector.shape_cast %18 : vector<1x128x64xf32> to vector<128x64xf32>
    %cst_12 = arith.constant dense<0.000000e+00> : vector<16x64xf32>
    %20 = tpu.matmul %16, %19, %cst_12 {dimension_numbers = #tpu.dot_dimension_numbers<[1], [0], [0], [1], [0, 0, 1, 1], [], []>} : vector<16x128xf32>, vector<128x64xf32>, vector<16x64xf32> -> vector<16x64xf32>
    %21 = arith.addf %17, %20 : vector<16x64xf32>
    %c0_13 = arith.constant 0 : index
    %c0_14 = arith.constant 0 : index
    %22 = vector.load %arg7[%c0_13, %c0_14] : memref<16x64xf32, #tpu.memory_space<vmem>>, vector<16x64xf32>
    tpu.vector_store %arg7[%c0_13, %c0_14], %21 {strides = array<i32>} : memref<16x64xf32, #tpu.memory_space<vmem>>, vector<16x64xf32>,
    %c0_i32_15 = arith.constant 0 : i32
    %23 = arith.cmpi eq, %arg2, %c0_i32_15 : i32
    %24 = arith.extui %23 : i1 to i32
    %c0_i32_16 = arith.constant 0 : i32
    %25 = arith.cmpi ne, %24, %c0_i32_16 : i32
    scf.if %25 {
      %c0_17 = arith.constant 0 : index
      %c0_18 = arith.constant 0 : index
      %26 = vector.load %arg7[%c0_17, %c0_18] : memref<16x64xf32, #tpu.memory_space<vmem>>, vector<16x64xf32>
      %c0_19 = arith.constant 0 : index
      %c0_20 = arith.constant 0 : index
      %c0_21 = arith.constant 0 : index
      %27 = vector.load %arg6[%c0_19, %c0_20, %c0_21] : memref<1x16x64xf32, #tpu.memory_space<vmem>>, vector<1x16x64xf32>
      %28 = vector.shape_cast %27 : vector<1x16x64xf32> to vector<16x64xf32>
      %29 = vector.shape_cast %26 : vector<16x64xf32> to vector<1x16x64xf32>
      tpu.vector_store %arg6[%c0_19, %c0_20, %c0_21], %29 {strides = array<i32>} : memref<1x16x64xf32, #tpu.memory_space<vmem>>, vector<1x16x64xf32>,
    } else {
    }
    return
  }
  func.func @transform_0(%arg0: i32, %arg1: i32, %arg2: i32) -> (i32, i32, i32) {
    %c0_i32 = arith.constant 0 : i32
    %c0_i32_0 = arith.constant 0 : i32
    return %arg0, %arg1, %c0_i32 : i32, i32, i32
  }
  func.func @transform_1(%arg0: i32, %arg1: i32, %arg2: i32) -> (i32, i32, i32) {
    %c0_i32 = arith.constant 0 : i32
    %c0_i32_0 = arith.constant 0 : i32
    return %arg0, %c0_i32, %arg2 : i32, i32, i32
  }
  func.func @transform_2(%arg0: i32, %arg1: i32, %arg2: i32) -> (i32, i32, i32) {
    %c0_i32 = arith.constant 0 : i32
    %c0_i32_0 = arith.constant 0 : i32
    return %arg0, %arg2, %c0_i32 : i32, i32, i32
  }
  func.func @transform_3(%arg0: i32, %arg1: i32, %arg2: i32) -> (i32, i32, i32) {
    %c0_i32 = arith.constant 0 : i32
    %c0_i32_0 = arith.constant 0 : i32
    return %arg0, %arg1, %c0_i32 : i32, i32, i32
  }
}

</mosaic_0001>

<llo_original>
// kernel: tpu_custom_call.1
$region0: #{tpu_custom_call.1}
  #allocation0 [shape = 'u32[]', space=smem, size = 0x4, offset = 0x4, fixed_abs, tag = 'smem constant byte address 0x4 - core index']
  #allocation1 [shape = 'u32[144,128]{1,0:T(1,128)}', space=vmem, size = 0x12000, scoped, tag = 'internal scratch']
  #allocation2 [shape = 'f32[16,64]{1,0:T(8,128)}', space=vmem, size = 0x2000, scoped, tag = 'scratch operand']
  %s0 = inlined_call_operand.vmem [shape: f32[2,16,64], index: 0, kind: input, shape index: {}]
  %s1 = inlined_call_operand.vmem [shape: f32[2,64,256], index: 1, kind: input, shape index: {}]
  %s2 = inlined_call_operand.vmem [shape: f32[2,128,64], index: 2, kind: input, shape index: {}]
  %s3 = inlined_call_operand.hbm [shape: f32[2,16,64], index: 3, kind: output, shape index: {}]
  %s4 = sld [smem:[#allocation0]]
  $region53: #{tpu_custom_call.1} parent=0
    _
  %s6 = ssub.s32 1, %s4
  %s7 = scalar_select 0, %s6, %s4
  $region1: #{tpu_custom_call.1} parent=0
    #allocation3 [shape = 'u8[16384]{0}', space=vmem, size = 0x4000, scoped, tag = 'output window, operand 0']
    #allocation4 [shape = 's32[2]{0}', space=sflag, size = 0x8, scoped, tag = 'scoped memory for tpu_custom_call.1']
    %8 = vsyncpa [#allocation4], 0
    %s9 = scalar_lea.sflag [#allocation4], 1
    %10 = vsyncpa %s9, 0
    loop: start=0, step=1, limit=4
    $region2: #{tpu_custom_call.1} parent=1 // loop_pre_header
      _
    $region3: #{tpu_custom_call.1} parent=1 // loop_header
      %s12 = sphi 0, %s16
      %p13 = scmp.ge.s32.totalorder %s12, 4
      %s19 = sphi 0, %s38
      %s20 = sphi 0, %s34
      %s21 = sphi 0, %s30
      %s22 = sphi 0, %s19
      %s23 = sphi 0, %s20
      %s24 = sphi 0, %s21
      %s25 = sphi 0, %s22
      %s26 = sphi 0, %s23
      %s27 = sphi 0, %s24
      %s43 = sphi 0, %s45
      %s46 = sphi 0, %s43
      %s47 = sphi 0, %s46
      %s63 = sphi 0, %s47
      %s71 = sphi 0, %s73
      %s74 = sphi 0, %s71
      %s75 = sphi 0, %s74
      %s91 = sphi 0, %s75
      %s99 = sphi 0, %s101
      %s102 = sphi 0, %s99
      %s103 = sphi 0, %s102
      %s119 = sphi 0, %s103
      %s127 = sphi 0, %s129
      %s130 = sphi 0, %s127
      %s131 = sphi 0, %s130
      %s147 = sphi 0, %s131
    $region4: #{tpu_custom_call.1} parent=1 // loop_header_branch
      %15 = sbr.rel (%p13) target = $region8
    $region5: #{tpu_custom_call.1} parent=1 // loop_body
      %s17 = ssub.s32 %s12, 1
      %s18 = ssub.s32 %s12, 2
      %s28 = sadd.s32 1, %s21
      %p29 = scmp.ge.s32.totalorder %s28, 1
      %s30 = scalar_select %p29, 0, %s28
      %s31 = sadd.s32 1, %s20
      %s32 = scalar_select %p29, %s31, %s20
      %p33 = scmp.ge.s32.totalorder %s32, 1
      %s34 = scalar_select %p33, 0, %s32
      %s35 = sadd.s32 1, %s19
      %s36 = scalar_select %p33, %s35, %s19
      %p37 = scmp.ge.s32.totalorder %s36, 2
      %s38 = scalar_select %p37, 0, %s36
      %s39 = ssub.s32 %s19, %s38
      %s40 = ssub.s32 %s20, %s34
      %s41 = sor.u32 %s39, %s40
      %p42 = scmp.eq.s32.totalorder %s41, 0
      %s44 = sadd.s32 %s43, 1
      %s45 = scalar_select %p42, %s43, %s44
      %p48 = pneg %p42
      %p49 = scmp.eq.s32.totalorder %s12, 1
      %p50 = por %p48, %p49
      %p51 = scmp.ne.s32.totalorder %s43, %s46
      %p52 = scmp.eq.s32.totalorder %s12, 0
      %p53 = por %p51, %p52
      %p54 = scmp.ne.s32.totalorder %s43, %s46
      %p55 = scmp.eq.s32.totalorder %s17, 1
      %p56 = por %p54, %p55
      %p57 = scmp.ne.s32.totalorder %s46, %s47
      %p58 = scmp.eq.s32.totalorder %s17, 0
      %p59 = por %p57, %p58
      %p60 = scmp.ne.s32.totalorder %s46, %s47
      %p61 = scmp.eq.s32.totalorder %s18, 1
      %p62 = por %p60, %p61
      %p64 = scmp.ne.s32.totalorder %s47, %s63
      %p65 = scmp.eq.s32.totalorder %s18, 0
      %p66 = por %p64, %p65
      %s67 = ssub.s32 %s19, %s38
      %s68 = ssub.s32 %s21, %s30
      %s69 = sor.u32 %s67, %s68
      %p70 = scmp.eq.s32.totalorder %s69, 0
      %s72 = sadd.s32 %s71, 1
      %s73 = scalar_select %p70, %s71, %s72
      %p76 = pneg %p70
      %p77 = scmp.eq.s32.totalorder %s12, 1
      %p78 = por %p76, %p77
      %p79 = scmp.ne.s32.totalorder %s71, %s74
      %p80 = scmp.eq.s32.totalorder %s12, 0
      %p81 = por %p79, %p80
      %p82 = scmp.ne.s32.totalorder %s71, %s74
      %p83 = scmp.eq.s32.totalorder %s17, 1
      %p84 = por %p82, %p83
      %p85 = scmp.ne.s32.totalorder %s74, %s75
      %p86 = scmp.eq.s32.totalorder %s17, 0
      %p87 = por %p85, %p86
      %p88 = scmp.ne.s32.totalorder %s74, %s75
      %p89 = scmp.eq.s32.totalorder %s18, 1
      %p90 = por %p88, %p89
      %p92 = scmp.ne.s32.totalorder %s75, %s91
      %p93 = scmp.eq.s32.totalorder %s18, 0
      %p94 = por %p92, %p93
      %s95 = ssub.s32 %s19, %s38
      %s96 = ssub.s32 %s21, %s30
      %s97 = sor.u32 %s95, %s96
      %p98 = scmp.eq.s32.totalorder %s97, 0
      %s100 = sadd.s32 %s99, 1
      %s101 = scalar_select %p98, %s99, %s100
      %p104 = pneg %p98
      %p105 = scmp.eq.s32.totalorder %s12, 1
      %p106 = por %p104, %p105
      %p107 = scmp.ne.s32.totalorder %s99, %s102
      %p108 = scmp.eq.s32.totalorder %s12, 0
      %p109 = por %p107, %p108
      %p110 = scmp.ne.s32.totalorder %s99, %s102
      %p111 = scmp.eq.s32.totalorder %s17, 1
      %p112 = por %p110, %p111
      %p113 = scmp.ne.s32.totalorder %s102, %s103
      %p114 = scmp.eq.s32.totalorder %s17, 0
      %p115 = por %p113, %p114
      %p116 = scmp.ne.s32.totalorder %s102, %s103
      %p117 = scmp.eq.s32.totalorder %s18, 1
      %p118 = por %p116, %p117
      %p120 = scmp.ne.s32.totalorder %s103, %s119
      %p121 = scmp.eq.s32.totalorder %s18, 0
      %p122 = por %p120, %p121
      %s123 = ssub.s32 %s19, %s38
      %s124 = ssub.s32 %s20, %s34
      %s125 = sor.u32 %s123, %s124
      %p126 = scmp.eq.s32.totalorder %s125, 0
      %s128 = sadd.s32 %s127, 1
      %s129 = scalar_select %p126, %s127, %s128
      %p132 = pneg %p126
      %p133 = scmp.eq.s32.totalorder %s12, 1
      %p134 = por %p132, %p133
      %p135 = scmp.ne.s32.totalorder %s127, %s130
      %p136 = scmp.eq.s32.totalorder %s12, 0
      %p137 = por %p135, %p136
      %p138 = scmp.ne.s32.totalorder %s127, %s130
      %p139 = scmp.eq.s32.totalorder %s17, 1
      %p140 = por %p138, %p139
      %p141 = scmp.ne.s32.totalorder %s130, %s131
      %p142 = scmp.eq.s32.totalorder %s17, 0
      %p143 = por %p141, %p142
      %p144 = scmp.ne.s32.totalorder %s130, %s131
      %p145 = scmp.eq.s32.totalorder %s18, 1
      %p146 = por %p144, %p145
      %p148 = scmp.ne.s32.totalorder %s131, %s147
      %p149 = scmp.eq.s32.totalorder %s18, 0
      %p150 = por %p148, %p149
      %p151 = scmp.le.s32.totalorder 1, %s12
      %p152 = scmp.lt.s32.totalorder %s12, 3
      %p153 = pnand %p151, %p152
      %p154 = pneg %p153
      // Predicated region
      $region9: #{tpu_custom_call.1} parent=5 // pred_check
        _
      $region10: #{tpu_custom_call.1} parent=5 // pred_check_branch
        %156 = sbr.rel (%p153) target = $region12
      $region11: #{tpu_custom_call.1} parent=5 // pred_region
        %s157 = ssub.s32 %s12, 1
      $region12: #{tpu_custom_call.1} parent=5 // pred_fallthru
        _
      %p158 = scmp.lt.s32.totalorder %s12, 2
      // Predicated region
      $region13: #{tpu_custom_call.1} parent=5 // pred_check
        %p159 = pneg %p158
      $region14: #{tpu_custom_call.1} parent=5 // pred_check_branch
        %161 = sbr.rel (%p159) target = $region16
      $region15: #{tpu_custom_call.1} parent=5 // pred_region
        // Predicated region
        $region17: #{tpu_custom_call.1} parent=15 // pred_check
          %p162 = pneg %p53
        $region18: #{tpu_custom_call.1} parent=15 // pred_check_branch
          %164 = sbr.rel (%p162) target = $region20
        $region19: #{tpu_custom_call.1} parent=15 // pred_region
          %s165 = smul.u32 2, %s20
          %p166 = scmp.lt.s32.totalorder %s19, 1
          %s167 = scalar_select %p166, %s19, 1
          %p168 = scmp.lt.s32.totalorder %s165, 1
          %s169 = scalar_select %p168, %s165, 1
          %s170 = smul.addr %s167, 2
          %s171 = sadd.s32 %s169, %s170
          %s172 = smul.addr %s171, 8
          %s173 = scalar_lea.vmem %s0, %s172
          %s174 = smul.u32 2, %s20
        $region20: #{tpu_custom_call.1} parent=15 // pred_fallthru
          _
        // Predicated region
        $region21: #{tpu_custom_call.1} parent=15 // pred_check
          %p175 = pneg %p81
        $region22: #{tpu_custom_call.1} parent=15 // pred_check_branch
          %177 = sbr.rel (%p175) target = $region24
        $region23: #{tpu_custom_call.1} parent=15 // pred_region
          %s178 = smul.u32 2, %s21
          %p179 = scmp.lt.s32.totalorder %s19, 1
          %s180 = scalar_select %p179, %s19, 1
          %p181 = scmp.lt.s32.totalorder %s178, 1
          %s182 = scalar_select %p181, %s178, 1
          %s183 = smul.addr %s180, 16
          %s184 = sadd.s32 %s182, %s183
          %s185 = smul.addr %s184, 8
          %s186 = scalar_lea.vmem %s1, %s185
          %s187 = smul.u32 2, %s21
        $region24: #{tpu_custom_call.1} parent=15 // pred_fallthru
          _
        // Predicated region
        $region25: #{tpu_custom_call.1} parent=15 // pred_check
          %p188 = pneg %p109
        $region26: #{tpu_custom_call.1} parent=15 // pred_check_branch
          %190 = sbr.rel (%p188) target = $region28
        $region27: #{tpu_custom_call.1} parent=15 // pred_region
          %s191 = smul.u32 16, %s21
          %p192 = scmp.lt.s32.totalorder %s19, 1
          %s193 = scalar_select %p192, %s19, 1
          %p194 = scmp.lt.s32.totalorder %s191, 15
          %s195 = scalar_select %p194, %s191, 15
          %s196 = smul.addr %s193, 16
          %s197 = sadd.s32 %s195, %s196
          %s198 = smul.addr %s197, 8
          %s199 = scalar_lea.vmem %s2, %s198
          %s200 = smul.u32 16, %s21
        $region28: #{tpu_custom_call.1} parent=15 // pred_fallthru
          _
      $region16: #{tpu_custom_call.1} parent=5 // pred_fallthru
        _
      %p201 = scmp.le.s32.totalorder 1, %s12
      %p202 = scmp.lt.s32.totalorder %s12, 3
      %p203 = pnand %p201, %p202
      %p204 = pneg %p203
      // Predicated region
      $region29: #{tpu_custom_call.1} parent=5 // pred_check
        _
      $region30: #{tpu_custom_call.1} parent=5 // pred_check_branch
        %206 = sbr.rel (%p203) target = $region32
      $region31: #{tpu_custom_call.1} parent=5 // pred_region
        %s207 = ssub.s32 %s12, 1
        %s208 = smul.u32 2, %s23
        %p209 = scmp.lt.s32.totalorder %s22, 1
        %s210 = scalar_select %p209, %s22, 1
        %p211 = scmp.lt.s32.totalorder %s208, 1
        %s212 = scalar_select %p211, %s208, 1
        %s213 = smul.addr %s210, 2
        %s214 = sadd.s32 %s212, %s213
        %s215 = smul.addr %s214, 8
        %s216 = scalar_lea.vmem %s0, %s215
        %p217 = pneg %p59
        %p218 = pneg %p56
        %s219 = smul.u32 2, %s24
        %p220 = scmp.lt.s32.totalorder %s22, 1
        %s221 = scalar_select %p220, %s22, 1
        %p222 = scmp.lt.s32.totalorder %s219, 1
        %s223 = scalar_select %p222, %s219, 1
        %s224 = smul.addr %s221, 16
        %s225 = sadd.s32 %s223, %s224
        %s226 = smul.addr %s225, 8
        %s227 = scalar_lea.vmem %s1, %s226
        %p228 = pneg %p87
        %p229 = pneg %p84
        %s230 = smul.u32 16, %s24
        %p231 = scmp.lt.s32.totalorder %s22, 1
        %s232 = scalar_select %p231, %s22, 1
        %p233 = scmp.lt.s32.totalorder %s230, 15
        %s234 = scalar_select %p233, %s230, 15
        %s235 = smul.addr %s232, 16
        %s236 = sadd.s32 %s234, %s235
        %s237 = smul.addr %s236, 8
        %s238 = scalar_lea.vmem %s2, %s237
        %p239 = pneg %p115
        %p240 = pneg %p112
        %p241 = pneg %p143
        %p242 = pneg %p140
        %s243 = sand.u32 %s130, 1
        %s244 = scalar_lea.sflag [#allocation4], %s243
        %s245 = sand.u32 %s130, 1
        %s246 = smul.addr %s245, 16
        %s247 = scalar_lea.vmem [#allocation3], %s246
        %s248 = smul.u32 2, %s23
        %p249 = scmp.lt.s32.totalorder %s22, 1
        %s250 = scalar_select %p249, %s22, 1
        %p251 = scmp.lt.s32.totalorder %s248, 1
        %s252 = scalar_select %p251, %s248, 1
        %s253 = smul.addr %s250, 2
        %s254 = sadd.s32 %s252, %s253
        %s255 = smul.addr %s254, 8
        %s256 = scalar_lea.vmem %s0, %s255
        %s257 = smul.u32 2, %s23
        %s258 = smul.u32 2, %s24
        %p259 = scmp.lt.s32.totalorder %s22, 1
        %s260 = scalar_select %p259, %s22, 1
        %p261 = scmp.lt.s32.totalorder %s258, 1
        %s262 = scalar_select %p261, %s258, 1
        %s263 = smul.addr %s260, 16
        %s264 = sadd.s32 %s262, %s263
        %s265 = smul.addr %s264, 8
        %s266 = scalar_lea.vmem %s1, %s265
        %s267 = smul.u32 2, %s24
        %s268 = smul.u32 16, %s24
        %p269 = scmp.lt.s32.totalorder %s22, 1
        %s270 = scalar_select %p269, %s22, 1
        %p271 = scmp.lt.s32.totalorder %s268, 15
        %s272 = scalar_select %p271, %s268, 15
        %s273 = smul.addr %s270, 16
        %s274 = sadd.s32 %s272, %s273
        %s275 = smul.addr %s274, 8
        %s276 = scalar_lea.vmem %s2, %s275
        %s277 = smul.u32 16, %s24
        %s278 = smul.u32 2, %s23
        %p279 = scmp.eq.s32.totalorder %s24, 0
        // Predicated region
        $region33: #{tpu_custom_call.1} parent=31 // pred_check
          %p280 = pneg %p279
        $region34: #{tpu_custom_call.1} parent=31 // pred_check_branch
          %282 = sbr.rel (%p280) target = $region36
        $region35: #{tpu_custom_call.1} parent=31 // pred_region
          %vm283 = vcmask 523264
          %284 = vst.msk [vmem:[#allocation2] sm:$0xff] %vm283, 0.0
          %285 = vst.msk [vmem:[#allocation2 + $0x8] sm:$0xff] %vm283, 0.0
        $region36: #{tpu_custom_call.1} parent=31 // pred_fallthru
          _
        %v286 = vld [vmem:[%s256] sm:$0xff]
        %v287 = vld [vmem:[%s256 + $0x8] sm:$0xff]
        %v288 = vld [vmem:[%s266] sm:$0xff]
        %v289 = vld [vmem:[%s266 + $0x8] sm:$0xff]
        %v290 = vld [vmem:[%s266 + $0x10] sm:$0xff]
        %v291 = vld [vmem:[%s266 + $0x18] sm:$0xff]
        %v292 = vld [vmem:[%s266 + $0x20] sm:$0xff]
        %v293 = vld [vmem:[%s266 + $0x28] sm:$0xff]
        %v294 = vld [vmem:[%s266 + $0x30] sm:$0xff]
        %v295 = vld [vmem:[%s266 + $0x38] sm:$0xff]
        %v296 = vld [vmem:[%s266 + $0x40] sm:$0xff]
        %v297 = vld [vmem:[%s266 + $0x48] sm:$0xff]
        %v298 = vld [vmem:[%s266 + $0x50] sm:$0xff]
        %v299 = vld [vmem:[%s266 + $0x58] sm:$0xff]
        %v300 = vld [vmem:[%s266 + $0x60] sm:$0xff]
        %v301 = vld [vmem:[%s266 + $0x68] sm:$0xff]
        %v302 = vld [vmem:[%s266 + $0x70] sm:$0xff]
        %v303 = vld [vmem:[%s266 + $0x78] sm:$0xff]
        %vm304 = vcmask 523264
        %v306 = vsel %vm304, %v286, 0
        %v309 = vsel %vm304, %v287, 0
        %311 = vmatprep.subr.mxu0 %v289
        %312 = vmatpush1.msra.mxu0 %v288
        %313 = vmatprep.subr.mxu0 %v291
        %314 = vmatpush1.msra.mxu0 %v290
        %315 = vmatprep.subr.mxu0 %v293
        %316 = vmatpush1.msra.mxu0 %v292
        %317 = vmatprep.subr.mxu0 %v295
        %318 = vmatpush1.msra.mxu0 %v294
        %319 = vmatprep.subr.mxu0 %v297
        %320 = vmatpush1.msra.mxu0 %v296
        %321 = vmatprep.subr.mxu0 %v299
        %322 = vmatpush1.msra.mxu0 %v298
        %323 = vmatprep.subr.mxu0 %v301
        %324 = vmatpush1.msra.mxu0 %v300
        %325 = vmatprep.subr.mxu0 %v303
        %326 = vmatpush1.msra.mxu0 %v302
        %327 = vmatprep.subr.mxu0 0.0
        %328 = vmatpush1.msra.mxu0 0.0
        %329 = vmatprep.subr.mxu0 0.0
        %330 = vmatpush1.msra.mxu0 0.0
        %331 = vmatprep.subr.mxu0 0.0
        %332 = vmatpush1.msra.mxu0 0.0
        %333 = vmatprep.subr.mxu0 0.0
        %334 = vmatpush1.msra.mxu0 0.0
        %335 = vmatprep.subr.mxu0 0.0
        %336 = vmatpush1.msra.mxu0 0.0
        %337 = vmatprep.subr.mxu0 0.0
        %338 = vmatpush1.msra.mxu0 0.0
        %339 = vmatprep.subr.mxu0 0.0
        %340 = vmatpush1.msra.mxu0 0.0
        %341 = vmatprep.subr.mxu0 0.0
        %342 = vmatpush1.msra.mxu0 0.0
        %343 = vmatprep.subr.mxu0 0.0
        %344 = vmatpush1.msra.mxu0 0.0
        %345 = vmatprep.subr.mxu0 0.0
        %346 = vmatpush1.msra.mxu0 0.0
        %347 = vmatprep.subr.mxu0 0.0
        %348 = vmatpush1.msra.mxu0 0.0
        %349 = vmatprep.subr.mxu0 0.0
        %350 = vmatpush1.msra.mxu0 0.0
        %351 = vmatprep.subr.mxu0 0.0
        %352 = vmatpush1.msra.mxu0 0.0
        %353 = vmatprep.subr.mxu0 0.0
        %354 = vmatpush1.msra.mxu0 0.0
        %355 = vmatprep.subr.mxu0 0.0
        %356 = vmatpush1.msra.mxu0 0.0
        %357 = vmatprep.subr.mxu0 0.0
        %358 = vmatpush1.msra.mxu0 0.0
        %359 = vmatprep.subr.mxu0 0.0
        %360 = vmatpush1.msra.mxu0 0.0
        %361 = vmatprep.subr.mxu0 0.0
        %362 = vmatpush1.msra.mxu0 0.0
        %363 = vmatprep.subr.mxu0 0.0
        %364 = vmatpush1.msra.mxu0 0.0
        %365 = vmatprep.subr.mxu0 0.0
        %366 = vmatpush1.msra.mxu0 0.0
        %367 = vmatprep.subr.mxu0 0.0
        %368 = vmatpush1.msra.mxu0 0.0
        %369 = vmatprep.subr.mxu0 0.0
        %370 = vmatpush1.msra.mxu0 0.0
        %371 = vmatprep.subr.mxu0 0.0
        %372 = vmatpush1.msra.mxu0 0.0
        %373 = vmatprep.subr.mxu0 0.0
        %374 = vmatpush1.msra.mxu0 0.0
        %375 = vmatprep.mubr.f32.mxu0 0.0
        %376 = vmatmul.mubr.f32.gmra.mrb[0].mxu0 %v306
        %v377 = vpop.f32.mrb[0].mxu0
        %v378 = vadd.f32 0.0, %v377
        %v379 = vpop.f32.mrb[0].mxu0
        %v380 = vadd.f32 0.0, %v379
        %381 = vmatprep.mubr.f32.mxu0 0.0
        %382 = vmatmul.mubr.f32.gmra.mrb[0].mxu0 %v309
        %v383 = vpop.f32.mrb[0].mxu0
        %v384 = vadd.f32 0.0, %v383
        %v385 = vpop.f32.mrb[0].mxu0
        %v386 = vadd.f32 0.0, %v385
        %387 = vdwg.mxu0
        %v388 = vxor.u32 %v378, 2147483648
        %v389 = vxor.u32 %v384, 2147483648
        %v390 = vmul.f32 %v388, 1.442695
        %v391 = vpow.pop %v390
        %v392 = vmul.f32 %v389, 1.442695
        %v393 = vpow.pop %v392
        %v394 = vadd.f32 %v391, 1.0
        %v395 = vadd.f32 %v393, 1.0
        %v396 = vrcp.pop %v394
        %v397 = vmul.f32 1.0, %v396
        %v398 = vrcp.pop %v395
        %v399 = vmul.f32 1.0, %v398
        %v400 = vmul.f32 %v378, %v397
        %v401 = vmul.f32 %v384, %v399
        %v402 = vmul.f32 %v380, %v400
        %v403 = vmul.f32 %v386, %v401
        %v404 = vld [vmem:[#allocation2] sm:$0xff]
        %v405 = vld [vmem:[#allocation2 + $0x8] sm:$0xff]
        %v406 = vld [vmem:[%s276] sm:$0xff]
        %v407 = vld [vmem:[%s276 + $0x8] sm:$0xff]
        %v408 = vld [vmem:[%s276 + $0x10] sm:$0xff]
        %v409 = vld [vmem:[%s276 + $0x18] sm:$0xff]
        %v410 = vld [vmem:[%s276 + $0x20] sm:$0xff]
        %v411 = vld [vmem:[%s276 + $0x28] sm:$0xff]
        %v412 = vld [vmem:[%s276 + $0x30] sm:$0xff]
        %v413 = vld [vmem:[%s276 + $0x38] sm:$0xff]
        %v414 = vld [vmem:[%s276 + $0x40] sm:$0xff]
        %v415 = vld [vmem:[%s276 + $0x48] sm:$0xff]
        %v416 = vld [vmem:[%s276 + $0x50] sm:$0xff]
        %v417 = vld [vmem:[%s276 + $0x58] sm:$0xff]
        %v418 = vld [vmem:[%s276 + $0x60] sm:$0xff]
        %v419 = vld [vmem:[%s276 + $0x68] sm:$0xff]
        %v420 = vld [vmem:[%s276 + $0x70] sm:$0xff]
        %v421 = vld [vmem:[%s276 + $0x78] sm:$0xff]
        %422 = vmatprep.subr.mxu0 0.0
        %423 = vmatpush1.msra.mxu0 %v406
        %424 = vmatprep.subr.mxu0 0.0
        %425 = vmatpush1.msra.mxu0 %v407
        %426 = vmatprep.subr.mxu0 0.0
        %427 = vmatpush1.msra.mxu0 %v408
        %428 = vmatprep.subr.mxu0 0.0
        %429 = vmatpush1.msra.mxu0 %v409
        %430 = vmatprep.subr.mxu0 0.0
        %431 = vmatpush1.msra.mxu0 %v410
        %432 = vmatprep.subr.mxu0 0.0
        %433 = vmatpush1.msra.mxu0 %v411
        %434 = vmatprep.subr.mxu0 0.0
        %435 = vmatpush1.msra.mxu0 %v412
        %436 = vmatprep.subr.mxu0 0.0
        %437 = vmatpush1.msra.mxu0 %v413
        %438 = vmatprep.subr.mxu0 0.0
        %439 = vmatpush1.msra.mxu0 %v414
        %440 = vmatprep.subr.mxu0 0.0
        %441 = vmatpush1.msra.mxu0 %v415
        %442 = vmatprep.subr.mxu0 0.0
        %443 = vmatpush1.msra.mxu0 %v416
        %444 = vmatprep.subr.mxu0 0.0
        %445 = vmatpush1.msra.mxu0 %v417
        %446 = vmatprep.subr.mxu0 0.0
        %447 = vmatpush1.msra.mxu0 %v418
        %448 = vmatprep.subr.mxu0 0.0
        %449 = vmatpush1.msra.mxu0 %v419
        %450 = vmatprep.subr.mxu0 0.0
        %451 = vmatpush1.msra.mxu0 %v420
        %452 = vmatprep.subr.mxu0 0.0
        %453 = vmatpush1.msra.mxu0 %v421
        %454 = vmatprep.subr.mxu0 0.0
        %455 = vmatpush1.msra.mxu0 0.0
        %456 = vmatprep.subr.mxu0 0.0
        %457 = vmatpush1.msra.mxu0 0.0
        %458 = vmatprep.subr.mxu0 0.0
        %459 = vmatpush1.msra.mxu0 0.0
        %460 = vmatprep.subr.mxu0 0.0
        %461 = vmatpush1.msra.mxu0 0.0
        %462 = vmatprep.subr.mxu0 0.0
        %463 = vmatpush1.msra.mxu0 0.0
        %464 = vmatprep.subr.mxu0 0.0
        %465 = vmatpush1.msra.mxu0 0.0
        %466 = vmatprep.subr.mxu0 0.0
        %467 = vmatpush1.msra.mxu0 0.0
        %468 = vmatprep.subr.mxu0 0.0
        %469 = vmatpush1.msra.mxu0 0.0
        %470 = vmatprep.subr.mxu0 0.0
        %471 = vmatpush1.msra.mxu0 0.0
        %472 = vmatprep.subr.mxu0 0.0
        %473 = vmatpush1.msra.mxu0 0.0
        %474 = vmatprep.subr.mxu0 0.0
        %475 = vmatpush1.msra.mxu0 0.0
        %476 = vmatprep.subr.mxu0 0.0
        %477 = vmatpush1.msra.mxu0 0.0
        %478 = vmatprep.subr.mxu0 0.0
        %479 = vmatpush1.msra.mxu0 0.0
        %480 = vmatprep.subr.mxu0 0.0
        %481 = vmatpush1.msra.mxu0 0.0
        %482 = vmatprep.subr.mxu0 0.0
        %483 = vmatpush1.msra.mxu0 0.0
        %484 = vmatprep.subr.mxu0 0.0
        %485 = vmatpush1.msra.mxu0 0.0
        %486 = vmatprep.mubr.f32.mxu0 0.0
        %487 = vmatmul.mubr.f32.gmra.mrb[0].mxu0 %v402
        %v488 = vpop.f32.mrb[0].mxu0
        %v489 = vadd.f32 0.0, %v488
        %v490 = vpop.f32.mrb[0].mxu0
        %491 = vmatprep.mubr.f32.mxu0 0.0
        %492 = vmatmul.mubr.f32.gmra.mrb[0].mxu0 %v403
        %v493 = vpop.f32.mrb[0].mxu0
        %v494 = vadd.f32 0.0, %v493
        %v495 = vpop.f32.mrb[0].mxu0
        %496 = vdwg.mxu0
        %v497 = vadd.f32 %v404, %v489
        %v498 = vadd.f32 %v405, %v494
        %499 = vst.msk [vmem:[#allocation2] sm:$0xff] %vm304, %v497
        %500 = vst.msk [vmem:[#allocation2 + $0x8] sm:$0xff] %vm304, %v498
        // Predicated region
        $region37: #{tpu_custom_call.1} parent=31 // pred_check
          %p501 = pneg %p279
        $region38: #{tpu_custom_call.1} parent=31 // pred_check_branch
          %503 = sbr.rel (%p501) target = $region40
        $region39: #{tpu_custom_call.1} parent=31 // pred_region
          %v504 = vld [vmem:[#allocation2] sm:$0xff]
          %v505 = vld [vmem:[#allocation2 + $0x8] sm:$0xff]
          %506 = vst.msk [vmem:[%s247] sm:$0xff] %vm304, %v504
          %507 = vst.msk [vmem:[%s247 + $0x8] sm:$0xff] %vm304, %v505
        $region40: #{tpu_custom_call.1} parent=31 // pred_fallthru
          _
        %s508 = sand.u32 %s130, 1
        %s509 = scalar_lea.sflag [#allocation4], %s508
        %s510 = sand.u32 %s130, 1
        %s511 = smul.addr %s510, 16
        %s512 = scalar_lea.vmem [#allocation3], %s511
        // Predicated region
        $region41: #{tpu_custom_call.1} parent=31 // pred_check
          %p513 = pneg %p140
        $region42: #{tpu_custom_call.1} parent=31 // pred_check_branch
          %515 = sbr.rel (%p513) target = $region44
        $region43: #{tpu_custom_call.1} parent=31 // pred_region
          %s516 = smul.u32 2, %s23
          %s518 = ssub.s32 256, 256
          %519 = vsyncadd %s509, %s518
          %s520 = smul.addr %s22, 2
          %s521 = sadd.s32 %s516, %s520
          %s522 = smul.addr %s521, 128
          %s523 = scalar_lea.hbm %s3, %s522
          %s524 = sshll.u32 %s512, 4
          %s525 = int_to_ptr.vmem [resolvable:$true] %s524
          %530 = dma.vmem_to_hbm [thread:$0]  %s525, 256, %s523, %s509, 128, 128, 8
        $region44: #{tpu_custom_call.1} parent=31 // pred_fallthru
          _
      $region32: #{tpu_custom_call.1} parent=5 // pred_fallthru
        _
      %p531 = scmp.le.s32.totalorder 2, %s12
      // Predicated region
      $region45: #{tpu_custom_call.1} parent=5 // pred_check
        %p532 = pneg %p531
      $region46: #{tpu_custom_call.1} parent=5 // pred_check_branch
        %534 = sbr.rel (%p532) target = $region48
      $region47: #{tpu_custom_call.1} parent=5 // pred_region
        %s535 = ssub.s32 %s12, 2
        // Predicated region
        $region49: #{tpu_custom_call.1} parent=47 // pred_check
          %p536 = pneg %p146
        $region50: #{tpu_custom_call.1} parent=47 // pred_check_branch
          %538 = sbr.rel (%p536) target = $region52
        $region51: #{tpu_custom_call.1} parent=47 // pred_region
          %s539 = sand.u32 %s131, 1
          %s540 = scalar_lea.sflag [#allocation4], %s539
          %s541 = sand.u32 %s131, 1
          %s542 = smul.addr %s541, 16
          %s543 = scalar_lea.vmem [#allocation3], %s542
          %544 = dma.done %s540, 256
        $region52: #{tpu_custom_call.1} parent=47 // pred_fallthru
          _
      $region48: #{tpu_custom_call.1} parent=5 // pred_fallthru
        _
    $region6: #{tpu_custom_call.1} parent=1 // loop_footer
      %s16 = sadd.s32 1, %s12
    $region7: #{tpu_custom_call.1} parent=1 // loop_footer_branch
      %11 = sbr.rel target = $region3
    $region8: #{tpu_custom_call.1} parent=1 // loop_exit
      _
    %545 = vsyncpa [#allocation4], 1
    %s546 = scalar_lea.sflag [#allocation4], 1
    %547 = vsyncpa %s546, 1

</llo_original>
